<compile_context>
chip_gen: v7x
topology: tpu7x:2x2x1
jax: 0.10.0
libtpu: 0.0.40
codegen_flags: <defaults>
</compile_context>

<pallas_src>
import jax
import jax.numpy as jnp
from jax.experimental import pallas as pl
from jax.experimental.pallas import tpu as pltpu


def _linreg_kernel(x_ref, w_ref, b_ref, o_ref):
    # x_ref: (TB, F)  streamed batch tile (VMEM, pipelined by BlockSpec)
    # w_ref: (8, F)   weight row broadcast to 8 sublanes (VMEM, resident)
    # b_ref: (1,)     scalar bias (SMEM)
    # o_ref: (1, TB)  lane-dense output row for this tile
    #
    # Contract over F on the MXU ("A @ B^T" form — the same dimension numbers
    # as the q @ k^T step of flash attention).  Putting the batch dim of x on
    # the MXU output columns makes the per-row sums lane-major, so the store is
    # one dense row per tile instead of TB/8 masked single-lane stores.
    res = jax.lax.dot_general(
        w_ref[...], x_ref[...],
        dimension_numbers=(((1,), (1,)), ((), ())),
        preferred_element_type=jnp.float32,
    )                                           # (8, TB); all 8 rows identical
    o_ref[...] = (res[0:1, :] + b_ref[0]).astype(o_ref.dtype)


def _physical_vmem_bytes():
    try:
        info = pltpu.get_tpu_info()
        cap = getattr(info, "vmem_capacity_bytes", None)
        if cap:
            return int(cap)
    except Exception:
        pass
    return 64 * 1024 * 1024  # conservative default (v7x per-TensorCore VMEM)


def linreg_forward(x, w, b, *, block_rows=None, force_pallas=False):
    """out = x @ w + b, matching torch.nn.Linear(n_features, 1).

    x: (B, F);  w: (F, 1) (transposed nn.Linear weight), (1, F) or (F,);
    b: scalar-like ((1,), (1, 1) or ()).  Returns (B, 1) in x.dtype.
    """
    x = jnp.asarray(x)
    B, F = x.shape
    w_row = jnp.asarray(w, dtype=jnp.float32).reshape(1, F)
    b_vec = jnp.asarray(b, dtype=jnp.float32).reshape(1)
    itemsize = x.dtype.itemsize

    # ---- generation-aware VMEM budget --------------------------------------
    phys_vmem = _physical_vmem_bytes()
    vmem_limit = max(32 * 2**20, min((phys_vmem * 3) // 4, 96 * 2**20))
    # A (., F) tile pads its lane dim to a multiple of 128 in VMEM.
    lane_padded_f = -(-F // 128) * 128
    vmem_row_bytes = lane_padded_f * itemsize
    w_vmem_bytes = 2 * 8 * lane_padded_f * itemsize      # double-buffered (8, F)
    headroom = 6 * 2**20                                  # dot result, out blocks, slack
    x_budget = vmem_limit - headroom - w_vmem_bytes
    # /3: two pipeline buffers for x plus a possible transposed-operand temp.
    tile_bytes = min(12 * 2**20, max(0, x_budget) // 3)
    tb_cap = tile_bytes // vmem_row_bytes

    # Tiny inputs (or an F so large that even an 8-row tile will not fit VMEM)
    # run as a plain XLA dot: at that size the pallas_call is pure overhead.
    # TODO(synk): add a K-tiled path (grid over F + f32 accumulator scratch) so
    # huge n_features stays on the Pallas path instead of falling back.
    too_small = (B * F * itemsize < 256 * 1024) or (B < 64)
    if (too_small and not force_pallas) or tb_cap < 8:
        out = x.astype(jnp.float32) @ w_row.T + b_vec
        return out.astype(x.dtype)

    # ---- batch tile: as big as the budget allows (multi-MiB streamed tiles) --
    TB = min(int(tb_cap), B)
    if block_rows is not None:
        TB = max(8, min(TB, int(block_rows)))
    if TB < B:
        TB = (TB // 128) * 128 if TB >= 128 else max(8, (TB // 8) * 8)
    # Keep >= ~4 tiles on large batches so megacore ("parallel") can split the
    # grid across both TensorCores; never shrink a tile below ~1024 rows for it.
    if B >= 4096:
        quarter = -(-B // 4)
        tb4 = max(1024, -(-quarter // 128) * 128)
        if tb4 < TB:
            TB = tb4
    n_tiles = pl.cdiv(B, TB)

    # Lane-dense weight row, broadcast to 8 sublanes so the MXU lhs uses a full
    # sublane tile (avoids an M=1 matmul).  Stays resident across all tiles.
    w8 = jnp.broadcast_to(w_row, (8, F)).astype(x.dtype)

    out_tiles = pl.pallas_call(
        _linreg_kernel,
        out_shape=jax.ShapeDtypeStruct((n_tiles, 1, TB), x.dtype),
        grid_spec=pltpu.PrefetchScalarGridSpec(
            num_scalar_prefetch=0,
            grid=(n_tiles,),
            in_specs=[
                pl.BlockSpec((TB, F), lambda i: (i, 0)),             # stream x tiles
                pl.BlockSpec((8, F), lambda i: (0, 0)),              # resident weight
                pl.BlockSpec(memory_space=pltpu.MemorySpace.SMEM),   # scalar bias
            ],
            # Lane-dense output: one (1, TB) row per tile (leading dim squeezed).
            out_specs=pl.BlockSpec((None, 1, TB), lambda i: (i, 0, 0)),
        ),
        compiler_params=pltpu.CompilerParams(
            dimension_semantics=("parallel",),
            vmem_limit_bytes=int(vmem_limit),
        ),
        cost_estimate=pl.CostEstimate(
            flops=2 * B * F,
            bytes_accessed=itemsize * (B * F + 8 * F + B),
            transcendentals=0,
        ),
    )(x, w8, b_vec)

    # The last tile may cover rows >= B (their lanes hold unspecified data);
    # drop them here instead of padding x, which would re-copy all of x in HBM.
    out = out_tiles.reshape(-1)[:B].reshape(B, 1)
    # TODO(synk): for F <= 64, pack 128 // F rows per 128-lane vector row
    # (wrapper reshape + in-kernel segmented reduce) to recover the ~128/F lane
    # and VMEM-tile utilization lost to lane padding at tiny feature counts.
    return out


if __name__ == "__main__":
    root = jax.random.PRNGKey(0)

    def make_case(case_key, batch, n_features):
        kx, kw, kb = jax.random.split(case_key, 3)
        x = jax.random.normal(kx, (batch, n_features), dtype=jnp.float32)
        w = jax.random.normal(kw, (n_features, 1), dtype=jnp.float32) * 0.1
        b = jax.random.normal(kb, (1, 1), dtype=jnp.float32) * 0.1
        return x, w, b

    # (batch, n_features, force_pallas, block_rows)
    cases = [
        (8, 32, False, None),     # LinReg toy shape -> plain-XLA fallback path
        (512, 32, True, None),    # Pallas path, single tile
        (300, 96, True, 128),     # Pallas path, ragged last tile (300 = 2*128 + 44)
        (256, 1024, True, None),  # Pallas path, wider feature dim on the MXU
    ]
    case_keys = jax.random.split(root, len(cases))
    for case_key, (batch, nf, force, brows) in zip(case_keys, cases):
        x, w, b = make_case(case_key, batch, nf)
        out = jax.block_until_ready(
            linreg_forward(x, w, b, force_pallas=force, block_rows=brows))
        ref = x @ w + b
        assert out.shape == (batch, 1), out.shape
        assert jnp.allclose(out, ref, atol=1e-3, rtol=1e-3), (
            f"mismatch at batch={batch} n_features={nf}")
    print("KERNEL_OK")
</pallas_src>

<mosaic_0001>
module attributes {stable_mosaic.version = 11 : i64} {
  func.func @_linreg_kernel(%arg0: i32, %arg1: memref<512x32xf32, #tpu.memory_space<vmem>>, %arg2: memref<8x32xf32, #tpu.memory_space<vmem>>, %arg3: memref<1xf32, #tpu.memory_space<smem>>, %arg4: memref<1x1x512xf32, #tpu.memory_space<vmem>>) attributes {dimension_semantics = [#tpu.dimension_semantics<parallel>], iteration_bounds = array<i64: 1>, scalar_prefetch = 0 : i64, scratch_operands = 0 : i64, tpu.core_type = #tpu.core_type<tc>, window_params = [{transform_indices = @transform_0, window_bounds = array<i64: 512, 32>}, {pipeline_mode = #tpu.pipeline_mode<synchronous>, transform_indices = @transform_1, window_bounds = array<i64: 8, 32>}, {transform_indices = @transform_2, window_bounds = array<i64: 1>}, {transform_indices = @transform_3, window_bounds = array<i64: 1, 1, 512>}]} {
    %c0 = arith.constant 0 : index
    %c0_0 = arith.constant 0 : index
    %0 = vector.load %arg2[%c0, %c0_0] : memref<8x32xf32, #tpu.memory_space<vmem>>, vector<8x32xf32>
    %c0_1 = arith.constant 0 : index
    %c0_2 = arith.constant 0 : index
    %1 = vector.load %arg1[%c0_1, %c0_2] : memref<512x32xf32, #tpu.memory_space<vmem>>, vector<512x32xf32>
    %cst = arith.constant dense<0.000000e+00> : vector<8x512xf32>
    %2 = tpu.matmul %0, %1, %cst {dimension_numbers = #tpu.dot_dimension_numbers<[1], [1], [0], [0], [0, 0, 1, 0], [], []>} : vector<8x32xf32>, vector<512x32xf32>, vector<8x512xf32> -> vector<8x512xf32>
    %3 = vector.extract_strided_slice %2 {offsets = [0, 0], sizes = [1, 512], strides = [1, 1]} : vector<8x512xf32> to vector<1x512xf32>
    %c0_3 = arith.constant 0 : index
    %4 = memref.load %arg3[%c0_3] : memref<1xf32, #tpu.memory_space<smem>>
    %5 = vector.broadcast %4 : f32 to vector<1x512xf32>
    %6 = arith.addf %3, %5 : vector<1x512xf32>
    %c0_4 = arith.constant 0 : index
    %c0_5 = arith.constant 0 : index
    %c0_6 = arith.constant 0 : index
    %7 = vector.load %arg4[%c0_4, %c0_5, %c0_6] : memref<1x1x512xf32, #tpu.memory_space<vmem>>, vector<1x1x512xf32>
    %8 = vector.shape_cast %7 : vector<1x1x512xf32> to vector<1x512xf32>
    %9 = vector.shape_cast %6 : vector<1x512xf32> to vector<1x1x512xf32>
    tpu.vector_store %arg4[%c0_4, %c0_5, %c0_6], %9 {strides = array<i32>} : memref<1x1x512xf32, #tpu.memory_space<vmem>>, vector<1x1x512xf32>,
    return
  }
  func.func @transform_0(%arg0: i32) -> (i32, i32) {
    %c0_i32 = arith.constant 0 : i32
    %c0_i32_0 = arith.constant 0 : i32
    return %arg0, %c0_i32 : i32, i32
  }
  func.func @transform_1(%arg0: i32) -> (i32, i32) {
    %c0_i32 = arith.constant 0 : i32
    %c0_i32_0 = arith.constant 0 : i32
    %c0_i32_1 = arith.constant 0 : i32
    return %c0_i32, %c0_i32_0 : i32, i32
  }
  func.func @transform_2(%arg0: i32) -> i32 {
    %c0_i32 = arith.constant 0 : i32
    %c0_i32_0 = arith.constant 0 : i32
    return %c0_i32 : i32
  }
  func.func @transform_3(%arg0: i32) -> (i32, i32, i32) {
    %c0_i32 = arith.constant 0 : i32
    %c0_i32_0 = arith.constant 0 : i32
    %c0_i32_1 = arith.constant 0 : i32
    return %arg0, %c0_i32, %c0_i32_0 : i32, i32, i32
  }
}

</mosaic_0001>

<llo_original>
// kernel: tpu_custom_call.1
$region0: #{tpu_custom_call.1}
  #allocation0 [shape = 'u32[]', space=smem, size = 0x4, offset = 0x4, fixed_abs, tag = 'smem constant byte address 0x4 - core index']
  #allocation1 [shape = 'u32[144,128]{1,0:T(1,128)}', space=vmem, size = 0x12000, scoped, tag = 'internal scratch']
  #allocation2 [shape = 'f32[1]{0:T(128)S(6)}', space=smem, size = 0x200, scoped, tag = 'scoped memory for tpu_custom_call.1']
  %s0 = inlined_call_operand.vmem [shape: f32[512,32], index: 0, kind: input, shape index: {}]
  %s1 = inlined_call_operand.vmem [shape: f32[8,32], index: 1, kind: input, shape index: {}]
  %s2 = inlined_call_operand.<no memory space> [shape: f32[1], index: 2, kind: input, shape index: {}]
  %s3 = inlined_call_operand.hbm [shape: f32[1,1,512], index: 3, kind: output, shape index: {}]
  %s4 = sld [smem:[#allocation0]]
  $region22: #{tpu_custom_call.1} parent=0
    _
  %s6 = ssub.s32 1, %s4
  %s7 = scalar_select 0, %s6, %s4
  %8 = sst [smem:[#allocation2]] %s2
  $region1: #{tpu_custom_call.1} parent=0
    #allocation3 [shape = 'u8[2048]{0}', space=vmem, size = 0x800, scoped, tag = 'output window, operand 0, single buffered']
    #allocation4 [shape = 's32[1]{0}', space=sflag, size = 0x4, scoped, tag = 'scoped memory for tpu_custom_call.1']
    %9 = vsyncpa [#allocation4], 0
    // Predicated region
    $region2: #{tpu_custom_call.1} parent=1 // pred_check
      _
    $region3: #{tpu_custom_call.1} parent=1 // pred_check_branch
      %11 = sbr.rel (0) target = $region5
    $region4: #{tpu_custom_call.1} parent=1 // pred_region
      _
    $region5: #{tpu_custom_call.1} parent=1 // pred_fallthru
      _
    // Predicated region
    $region6: #{tpu_custom_call.1} parent=1 // pred_check
      _
    $region7: #{tpu_custom_call.1} parent=1 // pred_check_branch
      %13 = sbr.rel (0) target = $region9
    $region8: #{tpu_custom_call.1} parent=1 // pred_region
      _
    $region9: #{tpu_custom_call.1} parent=1 // pred_fallthru
      _
    // Predicated region
    $region10: #{tpu_custom_call.1} parent=1 // pred_check
      _
    $region11: #{tpu_custom_call.1} parent=1 // pred_check_branch
      %15 = sbr.rel (0) target = $region13
    $region12: #{tpu_custom_call.1} parent=1 // pred_region
      _
    $region13: #{tpu_custom_call.1} parent=1 // pred_fallthru
      _
    %v16 = vld [vmem:[%s1] sm:$0xff]
    %v17 = vld [vmem:[%s0] sm:$0xff]
    %v18 = vld [vmem:[%s0 + $0x8] sm:$0xff]
    %v19 = vld [vmem:[%s0 + $0x10] sm:$0xff]
    %v20 = vld [vmem:[%s0 + $0x18] sm:$0xff]
    %v21 = vld [vmem:[%s0 + $0x20] sm:$0xff]
    %v22 = vld [vmem:[%s0 + $0x28] sm:$0xff]
    %v23 = vld [vmem:[%s0 + $0x30] sm:$0xff]
    %v24 = vld [vmem:[%s0 + $0x38] sm:$0xff]
    %v25 = vld [vmem:[%s0 + $0x40] sm:$0xff]
    %v26 = vld [vmem:[%s0 + $0x48] sm:$0xff]
    %v27 = vld [vmem:[%s0 + $0x50] sm:$0xff]
    %v28 = vld [vmem:[%s0 + $0x58] sm:$0xff]
    %v29 = vld [vmem:[%s0 + $0x60] sm:$0xff]
    %v30 = vld [vmem:[%s0 + $0x68] sm:$0xff]
    %v31 = vld [vmem:[%s0 + $0x70] sm:$0xff]
    %v32 = vld [vmem:[%s0 + $0x78] sm:$0xff]
    %v33 = vld [vmem:[%s0 + $0x80] sm:$0xff]
    %v34 = vld [vmem:[%s0 + $0x88] sm:$0xff]
    %v35 = vld [vmem:[%s0 + $0x90] sm:$0xff]
    %v36 = vld [vmem:[%s0 + $0x98] sm:$0xff]
    %v37 = vld [vmem:[%s0 + $0xa0] sm:$0xff]
    %v38 = vld [vmem:[%s0 + $0xa8] sm:$0xff]
    %v39 = vld [vmem:[%s0 + $0xb0] sm:$0xff]
    %v40 = vld [vmem:[%s0 + $0xb8] sm:$0xff]
    %v41 = vld [vmem:[%s0 + $0xc0] sm:$0xff]
    %v42 = vld [vmem:[%s0 + $0xc8] sm:$0xff]
    %v43 = vld [vmem:[%s0 + $0xd0] sm:$0xff]
    %v44 = vld [vmem:[%s0 + $0xd8] sm:$0xff]
    %v45 = vld [vmem:[%s0 + $0xe0] sm:$0xff]
    %v46 = vld [vmem:[%s0 + $0xe8] sm:$0xff]
    %v47 = vld [vmem:[%s0 + $0xf0] sm:$0xff]
    %v48 = vld [vmem:[%s0 + $0xf8] sm:$0xff]
    %v49 = vld [vmem:[%s0 + $0x100] sm:$0xff]
    %v50 = vld [vmem:[%s0 + $0x108] sm:$0xff]
    %v51 = vld [vmem:[%s0 + $0x110] sm:$0xff]
    %v52 = vld [vmem:[%s0 + $0x118] sm:$0xff]
    %v53 = vld [vmem:[%s0 + $0x120] sm:$0xff]
    %v54 = vld [vmem:[%s0 + $0x128] sm:$0xff]
    %v55 = vld [vmem:[%s0 + $0x130] sm:$0xff]
    %v56 = vld [vmem:[%s0 + $0x138] sm:$0xff]
    %v57 = vld [vmem:[%s0 + $0x140] sm:$0xff]
    %v58 = vld [vmem:[%s0 + $0x148] sm:$0xff]
    %v59 = vld [vmem:[%s0 + $0x150] sm:$0xff]
    %v60 = vld [vmem:[%s0 + $0x158] sm:$0xff]
    %v61 = vld [vmem:[%s0 + $0x160] sm:$0xff]
    %v62 = vld [vmem:[%s0 + $0x168] sm:$0xff]
    %v63 = vld [vmem:[%s0 + $0x170] sm:$0xff]
    %v64 = vld [vmem:[%s0 + $0x178] sm:$0xff]
    %v65 = vld [vmem:[%s0 + $0x180] sm:$0xff]
    %v66 = vld [vmem:[%s0 + $0x188] sm:$0xff]
    %v67 = vld [vmem:[%s0 + $0x190] sm:$0xff]
    %v68 = vld [vmem:[%s0 + $0x198] sm:$0xff]
    %v69 = vld [vmem:[%s0 + $0x1a0] sm:$0xff]
    %v70 = vld [vmem:[%s0 + $0x1a8] sm:$0xff]
    %v71 = vld [vmem:[%s0 + $0x1b0] sm:$0xff]
    %v72 = vld [vmem:[%s0 + $0x1b8] sm:$0xff]
    %v73 = vld [vmem:[%s0 + $0x1c0] sm:$0xff]
    %v74 = vld [vmem:[%s0 + $0x1c8] sm:$0xff]
    %v75 = vld [vmem:[%s0 + $0x1d0] sm:$0xff]
    %v76 = vld [vmem:[%s0 + $0x1d8] sm:$0xff]
    %v77 = vld [vmem:[%s0 + $0x1e0] sm:$0xff]
    %v78 = vld [vmem:[%s0 + $0x1e8] sm:$0xff]
    %v79 = vld [vmem:[%s0 + $0x1f0] sm:$0xff]
    %v80 = vld [vmem:[%s0 + $0x1f8] sm:$0xff]
    %vm81 = vcmask 261120
    %v83 = vsel %vm81, %v16, 0
    %v86 = vsel %vm81, %v17, 0
    %v89 = vsel %vm81, %v18, 0
    %v92 = vsel %vm81, %v19, 0
    %v95 = vsel %vm81, %v20, 0
    %v98 = vsel %vm81, %v21, 0
    %v101 = vsel %vm81, %v22, 0
    %v104 = vsel %vm81, %v23, 0
    %v107 = vsel %vm81, %v24, 0
    %v110 = vsel %vm81, %v25, 0
    %v113 = vsel %vm81, %v26, 0
    %v116 = vsel %vm81, %v27, 0
    %v119 = vsel %vm81, %v28, 0
    %v122 = vsel %vm81, %v29, 0
    %v125 = vsel %vm81, %v30, 0
    %v128 = vsel %vm81, %v31, 0
    %v131 = vsel %vm81, %v32, 0
    %v134 = vsel %vm81, %v33, 0
    %v137 = vsel %vm81, %v34, 0
    %v140 = vsel %vm81, %v35, 0
    %v143 = vsel %vm81, %v36, 0
    %v146 = vsel %vm81, %v37, 0
    %v149 = vsel %vm81, %v38, 0
    %v152 = vsel %vm81, %v39, 0
    %v155 = vsel %vm81, %v40, 0
    %v158 = vsel %vm81, %v41, 0
    %v161 = vsel %vm81, %v42, 0
    %v164 = vsel %vm81, %v43, 0
    %v167 = vsel %vm81, %v44, 0
    %v170 = vsel %vm81, %v45, 0
    %v173 = vsel %vm81, %v46, 0
    %v176 = vsel %vm81, %v47, 0
    %v179 = vsel %vm81, %v48, 0
    %v182 = vsel %vm81, %v49, 0
    %v185 = vsel %vm81, %v50, 0
    %v188 = vsel %vm81, %v51, 0
    %v191 = vsel %vm81, %v52, 0
    %v194 = vsel %vm81, %v53, 0
    %v197 = vsel %vm81, %v54, 0
    %v200 = vsel %vm81, %v55, 0
    %v203 = vsel %vm81, %v56, 0
    %v206 = vsel %vm81, %v57, 0
    %v209 = vsel %vm81, %v58, 0
    %v212 = vsel %vm81, %v59, 0
    %v215 = vsel %vm81, %v60, 0
    %v218 = vsel %vm81, %v61, 0
    %v221 = vsel %vm81, %v62, 0
    %v224 = vsel %vm81, %v63, 0
    %v227 = vsel %vm81, %v64, 0
    %v230 = vsel %vm81, %v65, 0
    %v233 = vsel %vm81, %v66, 0
    %v236 = vsel %vm81, %v67, 0
    %v239 = vsel %vm81, %v68, 0
    %v242 = vsel %vm81, %v69, 0
    %v245 = vsel %vm81, %v70, 0
    %v248 = vsel %vm81, %v71, 0
    %v251 = vsel %vm81, %v72, 0
    %v254 = vsel %vm81, %v73, 0
    %v257 = vsel %vm81, %v74, 0
    %v260 = vsel %vm81, %v75, 0
    %v263 = vsel %vm81, %v76, 0
    %v266 = vsel %vm81, %v77, 0
    %v269 = vsel %vm81, %v78, 0
    %v272 = vsel %vm81, %v79, 0
    %v275 = vsel %vm81, %v80, 0
    %277 = vmatprep.subr.mxu0 0.0
    %278 = vmatpush1.xpose.msra.mxu0 %v86
    %279 = vmatprep.subr.mxu0 0.0
    %280 = vmatpush1.xpose.msra.mxu0 %v89
    %281 = vmatprep.subr.mxu0 0.0
    %282 = vmatpush1.xpose.msra.mxu0 %v92
    %283 = vmatprep.subr.mxu0 0.0
    %284 = vmatpush1.xpose.msra.mxu0 %v95
    %285 = vmatprep.subr.mxu0 0.0
    %286 = vmatpush1.xpose.msra.mxu0 %v98
    %287 = vmatprep.subr.mxu0 0.0
    %288 = vmatpush1.xpose.msra.mxu0 %v101
    %289 = vmatprep.subr.mxu0 0.0
    %290 = vmatpush1.xpose.msra.mxu0 %v104
    %291 = vmatprep.subr.mxu0 0.0
    %292 = vmatpush1.xpose.msra.mxu0 %v107
    %293 = vmatprep.subr.mxu0 0.0
    %294 = vmatpush1.xpose.msra.mxu0 %v110
    %295 = vmatprep.subr.mxu0 0.0
    %296 = vmatpush1.xpose.msra.mxu0 %v113
    %297 = vmatprep.subr.mxu0 0.0
    %298 = vmatpush1.xpose.msra.mxu0 %v116
    %299 = vmatprep.subr.mxu0 0.0
    %300 = vmatpush1.xpose.msra.mxu0 %v119
    %301 = vmatprep.subr.mxu0 0.0
    %302 = vmatpush1.xpose.msra.mxu0 %v122
    %303 = vmatprep.subr.mxu0 0.0
    %304 = vmatpush1.xpose.msra.mxu0 %v125
    %305 = vmatprep.subr.mxu0 0.0
    %306 = vmatpush1.xpose.msra.mxu0 %v128
    %307 = vmatprep.subr.mxu0 0.0
    %308 = vmatpush1.xpose.msra.mxu0 %v131
    %309 = vmatprep.subr.mxu0 0.0
    %310 = vmatpush1.xpose.msra.mxu0 %v134
    %311 = vmatprep.subr.mxu0 0.0
    %312 = vmatpush1.xpose.msra.mxu0 %v137
    %313 = vmatprep.subr.mxu0 0.0
    %314 = vmatpush1.xpose.msra.mxu0 %v140
    %315 = vmatprep.subr.mxu0 0.0
    %316 = vmatpush1.xpose.msra.mxu0 %v143
    %317 = vmatprep.subr.mxu0 0.0
    %318 = vmatpush1.xpose.msra.mxu0 %v146
    %319 = vmatprep.subr.mxu0 0.0
    %320 = vmatpush1.xpose.msra.mxu0 %v149
    %321 = vmatprep.subr.mxu0 0.0
    %322 = vmatpush1.xpose.msra.mxu0 %v152
    %323 = vmatprep.subr.mxu0 0.0
    %324 = vmatpush1.xpose.msra.mxu0 %v155
    %325 = vmatprep.subr.mxu0 0.0
    %326 = vmatpush1.xpose.msra.mxu0 %v158
    %327 = vmatprep.subr.mxu0 0.0
    %328 = vmatpush1.xpose.msra.mxu0 %v161
    %329 = vmatprep.subr.mxu0 0.0
    %330 = vmatpush1.xpose.msra.mxu0 %v164
    %331 = vmatprep.subr.mxu0 0.0
    %332 = vmatpush1.xpose.msra.mxu0 %v167
    %333 = vmatprep.subr.mxu0 0.0
    %334 = vmatpush1.xpose.msra.mxu0 %v170
    %335 = vmatprep.subr.mxu0 0.0
    %336 = vmatpush1.xpose.msra.mxu0 %v173
    %337 = vmatprep.subr.mxu0 0.0
    %338 = vmatpush1.xpose.msra.mxu0 %v176
    %339 = vmatprep.subr.mxu0 0.0
    %340 = vmatpush1.xpose.msra.mxu0 %v179
    %341 = vmatprep.mubr.f32.mxu0 0.0
    %342 = vmatmul.mubr.f32.gmra.mrb[0].mxu0 %v83
    %v343 = vpop.f32.mrb[0].mxu0
    %v344 = vadd.f32 0.0, %v343
    %v345 = vpop.f32.mrb[0].mxu0
    %v346 = vadd.f32 0.0, %v345
    %347 = vdwg.mxu0
    %348 = vmatprep.subr.mxu0 0.0
    %349 = vmatpush1.xpose.msra.mxu0 %v182
    %350 = vmatprep.subr.mxu0 0.0
    %351 = vmatpush1.xpose.msra.mxu0 %v185
    %352 = vmatprep.subr.mxu0 0.0
    %353 = vmatpush1.xpose.msra.mxu0 %v188
    %354 = vmatprep.subr.mxu0 0.0
    %355 = vmatpush1.xpose.msra.mxu0 %v191
    %356 = vmatprep.subr.mxu0 0.0
    %357 = vmatpush1.xpose.msra.mxu0 %v194
    %358 = vmatprep.subr.mxu0 0.0
    %359 = vmatpush1.xpose.msra.mxu0 %v197
    %360 = vmatprep.subr.mxu0 0.0
    %361 = vmatpush1.xpose.msra.mxu0 %v200
    %362 = vmatprep.subr.mxu0 0.0
    %363 = vmatpush1.xpose.msra.mxu0 %v203
    %364 = vmatprep.subr.mxu0 0.0
    %365 = vmatpush1.xpose.msra.mxu0 %v206
    %366 = vmatprep.subr.mxu0 0.0
    %367 = vmatpush1.xpose.msra.mxu0 %v209
    %368 = vmatprep.subr.mxu0 0.0
    %369 = vmatpush1.xpose.msra.mxu0 %v212
    %370 = vmatprep.subr.mxu0 0.0
    %371 = vmatpush1.xpose.msra.mxu0 %v215
    %372 = vmatprep.subr.mxu0 0.0
    %373 = vmatpush1.xpose.msra.mxu0 %v218
    %374 = vmatprep.subr.mxu0 0.0
    %375 = vmatpush1.xpose.msra.mxu0 %v221
    %376 = vmatprep.subr.mxu0 0.0
    %377 = vmatpush1.xpose.msra.mxu0 %v224
    %378 = vmatprep.subr.mxu0 0.0
    %379 = vmatpush1.xpose.msra.mxu0 %v227
    %380 = vmatprep.subr.mxu0 0.0
    %381 = vmatpush1.xpose.msra.mxu0 %v230
    %382 = vmatprep.subr.mxu0 0.0
    %383 = vmatpush1.xpose.msra.mxu0 %v233
    %384 = vmatprep.subr.mxu0 0.0
    %385 = vmatpush1.xpose.msra.mxu0 %v236
    %386 = vmatprep.subr.mxu0 0.0
    %387 = vmatpush1.xpose.msra.mxu0 %v239
    %388 = vmatprep.subr.mxu0 0.0
    %389 = vmatpush1.xpose.msra.mxu0 %v242
    %390 = vmatprep.subr.mxu0 0.0
    %391 = vmatpush1.xpose.msra.mxu0 %v245
    %392 = vmatprep.subr.mxu0 0.0
    %393 = vmatpush1.xpose.msra.mxu0 %v248
    %394 = vmatprep.subr.mxu0 0.0
    %395 = vmatpush1.xpose.msra.mxu0 %v251
    %396 = vmatprep.subr.mxu0 0.0
    %397 = vmatpush1.xpose.msra.mxu0 %v254
    %398 = vmatprep.subr.mxu0 0.0
    %399 = vmatpush1.xpose.msra.mxu0 %v257
    %400 = vmatprep.subr.mxu0 0.0
    %401 = vmatpush1.xpose.msra.mxu0 %v260
    %402 = vmatprep.subr.mxu0 0.0
    %403 = vmatpush1.xpose.msra.mxu0 %v263
    %404 = vmatprep.subr.mxu0 0.0
    %405 = vmatpush1.xpose.msra.mxu0 %v266
    %406 = vmatprep.subr.mxu0 0.0
    %407 = vmatpush1.xpose.msra.mxu0 %v269
    %408 = vmatprep.subr.mxu0 0.0
    %409 = vmatpush1.xpose.msra.mxu0 %v272
    %410 = vmatprep.subr.mxu0 0.0
    %411 = vmatpush1.xpose.msra.mxu0 %v275
    %412 = vmatprep.mubr.f32.mxu0 0.0
    %413 = vmatmul.mubr.f32.gmra.mrb[0].mxu0 %v83
    %v414 = vpop.f32.mrb[0].mxu0
    %v415 = vadd.f32 0.0, %v414
    %v416 = vpop.f32.mrb[0].mxu0
    %v417 = vadd.f32 0.0, %v416
    %418 = vdwg.mxu0
    %s419 = sld [smem:[#allocation2]]
    %v420 = vstv %s419
    %v421 = vadd.f32 %v344, %v420
    %v422 = vadd.f32 %v346, %v420
    %v423 = vadd.f32 %v415, %v420
    %v424 = vadd.f32 %v417, %v420
    %v429 = vcombine.low %v421, %v422
    %v430 = vcombine.low %v423, %v424
    %v432 = vunpack.c.l.s4 1966171168
    %v433 = vunpack.c.0.s8 %v432
    %v434 = vlaneseq
    %v435 = vshrl.u32 %v434, 7
    %v436 = vsub.s32 %v433, %v435
    %v437 = vrot.slane %v429, %v436
    %v439 = vunpack.c.l.s4 1966171168
    %v440 = vunpack.c.0.s8 %v439
    %v441 = vlaneseq
    %v442 = vshrl.u32 %v441, 7
    %v443 = vsub.s32 %v440, %v442
    %v444 = vrot.slane %v430, %v443
    %v445 = vcombine.low %v437, %v444
    %v447 = vunpack.c.l.s4 1966171168
    %v448 = vunpack.c.0.s8 %v447
    %v449 = vlaneseq
    %v450 = vshrl.u32 %v449, 7
    %v451 = vsub.s32 %v448, %v450
    %v452 = vrot.slane %v445, %v451
    %v454 = vlaneseq
    %vm455 = vcmp.ge.s32.totalorder %v454, 0
    %vm456 = vcmp.lt.s32.totalorder %v454, 512
    %vm457 = vmand %vm455, %vm456
    %458 = vst.msk [vmem:[#allocation3] sm:$0xf] %vm457, %v452
    // Predicated region
    $region14: #{tpu_custom_call.1} parent=1 // pred_check
      _
    $region15: #{tpu_custom_call.1} parent=1 // pred_check_branch
      %460 = sbr.rel (0) target = $region17
    $region16: #{tpu_custom_call.1} parent=1 // pred_region
      %s462 = ssub.s32 64, 64
      %463 = vsyncadd [#allocation4], %s462
      %s465 = sshll.u32 [#allocation3], 4
      %s466 = int_to_ptr.vmem [resolvable:$true] %s465
      %468 = dma.vmem_to_hbm [thread:$0]  %s466, 64, %s3, [#allocation4]
    $region17: #{tpu_custom_call.1} parent=1 // pred_fallthru
      _
    // Predicated region
    $region18: #{tpu_custom_call.1} parent=1 // pred_check
      _
    $region19: #{tpu_custom_call.1} parent=1 // pred_check_branch
      %470 = sbr.rel (0) target = $region21
    $region20: #{tpu_custom_call.1} parent=1 // pred_region
      %471 = dma.done [#allocation4], 64
    $region21: #{tpu_custom_call.1} parent=1 // pred_fallthru
      _
    %472 = vsyncpa [#allocation4], 1

</llo_original>
